<compile_context>
chip_gen: v5e
topology: v5e:2x2
jax: 0.10.0
libtpu: 0.0.40
codegen_flags: <defaults>
</compile_context>

<pallas_src>
import jax
import jax.numpy as jnp
from jax.experimental import pallas as pl
from jax.experimental.pallas import tpu as pltpu


def _instance_node_attention_kernel(x_ref, w1_ref, b1_ref, w2_ref, b2_ref,
                                    newx_ref, att_ref):
    gb, n, h = x_ref.shape           # graphs-per-block, nodes-per-graph, hidden
    h2 = w1_ref.shape[1]

    x3 = x_ref[...]                                  # [GB, N, H]  f32
    x2 = x3.reshape(gb * n, h)                       # collapse leading dims (layout-free)

    # ---- Linear(H -> 2H): bf16 on the MXU, f32 accumulation ----
    h1 = jnp.dot(x2.astype(jnp.bfloat16), w1_ref[...],
                 preferred_element_type=jnp.float32) + b1_ref[...]   # [GB*N, 2H]

    # ---- InstanceNorm per graph (affine=False, eps=1e-5), single fused stats pass ----
    h1g = h1.reshape(gb, n, h2)                      # [GB, N, 2H]
    inv_n = jnp.float32(1.0 / n)
    s = jnp.sum(h1g, axis=1, keepdims=True)          # [GB, 1, 2H]
    ss = jnp.sum(h1g * h1g, axis=1, keepdims=True)   # [GB, 1, 2H]
    mean = s * inv_n
    var = jnp.maximum(ss * inv_n - mean * mean, 0.0)  # biased var; clamp cancellation
    h1n = (h1g - mean) * jax.lax.rsqrt(var + 1e-5)

    # ---- ReLU (Dropout is identity in eval) ----
    h1r = jnp.maximum(h1n, 0.0).reshape(gb * n, h2)

    # ---- Linear(2H -> H): bf16 on the MXU, f32 accumulation ----
    att_logits = jnp.dot(h1r.astype(jnp.bfloat16), w2_ref[...],
                         preferred_element_type=jnp.float32) + b2_ref[...]  # [GB*N, H]

    # ---- _sampling(train=False): plain sigmoid ----
    att = jax.nn.sigmoid(att_logits).reshape(gb, n, h)

    att_ref[...] = att.astype(att_ref.dtype)
    newx_ref[...] = (x3 * att).astype(newx_ref.dtype)


def _pick_graphs_per_block(G, N, target_rows=128):
    """Largest divisor of G s.t. GB*N ~ target_rows (fills MXU M-dim, keeps >1 grid step)."""
    gb = max(1, min(G, max(1, target_rows // max(N, 1))))
    while G % gb:
        gb -= 1
    return gb


def instance_node_attention(x, w1, b1, w2, b2, *, graphs_per_block=None):
    """
    x : [G, N, H] f32 — G equal-sized graphs of N nodes (or [N, H] == single graph).
    w1: [H, 2H], b1: [2H], w2: [2H, H], b2: [H]   (Linear weights stored [in, out]).
    Returns (new_x, att), same leading shape as x, float32.
    """
    squeeze = False
    if x.ndim == 2:                 # original batch=None single-graph call signature
        x = x[None]
        squeeze = True

    G, N, H = x.shape
    H2 = w1.shape[1]
    assert w1.shape == (H, H2) and w2.shape == (H2, H)

    GB = graphs_per_block if graphs_per_block is not None else _pick_graphs_per_block(G, N)
    assert G % GB == 0
    num_blocks = G // GB

    # Cast weights to bf16 once (halves their VMEM footprint, native MXU dtype).
    w1b = w1.astype(jnp.bfloat16)
    w2b = w2.astype(jnp.bfloat16)
    b1r = b1.reshape(1, H2).astype(jnp.float32)
    b2r = b2.reshape(1, H).astype(jnp.float32)

    cost = pl.CostEstimate(
        flops=4 * G * N * H * H2,                       # two matmuls, 2*M*K*N each
        transcendentals=G * N * H + G * H2,             # sigmoid + rsqrt
        bytes_accessed=(x.size * 4 + w1b.size * 2 + w2b.size * 2
                        + b1r.size * 4 + b2r.size * 4 + 2 * G * N * H * 4),
    )

    tile3 = pl.BlockSpec((GB, N, H), lambda g: (g, 0, 0))

    new_x, att = pl.pallas_call(
        _instance_node_attention_kernel,
        out_shape=(
            jax.ShapeDtypeStruct((G, N, H), jnp.float32),   # new_x
            jax.ShapeDtypeStruct((G, N, H), jnp.float32),   # att
        ),
        grid=(num_blocks,),
        in_specs=[
            tile3,                                           # x block
            pl.BlockSpec((H, H2), lambda g: (0, 0)),         # w1 (bf16, shared)
            pl.BlockSpec((1, H2), lambda g: (0, 0)),         # b1
            pl.BlockSpec((H2, H), lambda g: (0, 0)),         # w2 (bf16, shared)
            pl.BlockSpec((1, H), lambda g: (0, 0)),          # b2
        ],
        out_specs=(tile3, tile3),
        compiler_params=pltpu.CompilerParams(
            dimension_semantics=("parallel",),               # shard blocks across v7x cores
            vmem_limit_bytes=32 * 1024 * 1024,               # explicit, safe on v5e/v6e/v7x
        ),
        cost_estimate=cost,
    )(x, w1b, b1r, w2b, b2r)

    if squeeze:
        return new_x[0], att[0]
    return new_x, att


def _reference(x, w1, b1, w2, b2):
    """Pure-JAX f32 reference of the eval forward pass (per-graph InstanceNorm)."""
    h1 = jnp.einsum("gnh,hk->gnk", x, w1) + b1
    mean = jnp.mean(h1, axis=1, keepdims=True)
    var = jnp.mean((h1 - mean) ** 2, axis=1, keepdims=True)
    h1n = (h1 - mean) / jnp.sqrt(var + 1e-5)
    h1r = jnp.maximum(h1n, 0.0)
    logits = jnp.einsum("gnk,kh->gnh", h1r, w2) + b2
    att = jax.nn.sigmoid(logits)
    return x * att, att


if __name__ == "__main__":
    # G graphs of N nodes each, hidden size H (small shapes consistent with the module).
    G, N, H = 16, 16, 32
    H2 = 2 * H

    key = jax.random.PRNGKey(0)
    kx, k1, k2, k3, k4 = jax.random.split(key, 5)

    x = jax.random.normal(kx, (G, N, H), dtype=jnp.float32)
    w1 = jax.random.normal(k1, (H, H2), dtype=jnp.float32) * (1.0 / jnp.sqrt(H))
    b1 = jax.random.normal(k2, (H2,), dtype=jnp.float32) * 0.01
    w2 = jax.random.normal(k3, (H2, H), dtype=jnp.float32) * (1.0 / jnp.sqrt(H2))
    b2 = jax.random.normal(k4, (H,), dtype=jnp.float32) * 0.01

    new_x, att = instance_node_attention(x, w1, b1, w2, b2)
    jax.block_until_ready((new_x, att))

    # Sanity + numerical checks (generous tolerance: matmuls run in bf16).
    ref_new_x, ref_att = _reference(x, w1, b1, w2, b2)
    assert new_x.shape == (G, N, H) and att.shape == (G, N, H)
    assert bool(jnp.all(jnp.isfinite(new_x))) and bool(jnp.all(jnp.isfinite(att)))
    assert bool(jnp.all(att >= 0.0)) and bool(jnp.all(att <= 1.0))
    assert float(jnp.max(jnp.abs(att - ref_att))) < 0.15
    assert float(jnp.max(jnp.abs(new_x - ref_new_x))) < 0.5

    print("KERNEL_OK")
</pallas_src>

<mosaic_0001>
module attributes {stable_mosaic.version = 11 : i64} {
  func.func @_instance_node_attention_kernel(%arg0: i32, %arg1: memref<8x16x32xf32, #tpu.memory_space<vmem>>, %arg2: memref<32x64xbf16, #tpu.memory_space<vmem>>, %arg3: memref<1x64xf32, #tpu.memory_space<vmem>>, %arg4: memref<64x32xbf16, #tpu.memory_space<vmem>>, %arg5: memref<1x32xf32, #tpu.memory_space<vmem>>, %arg6: memref<8x16x32xf32, #tpu.memory_space<vmem>>, %arg7: memref<8x16x32xf32, #tpu.memory_space<vmem>>) attributes {dimension_semantics = [#tpu.dimension_semantics<parallel>], iteration_bounds = array<i64: 2>, scalar_prefetch = 0 : i64, scratch_operands = 0 : i64, tpu.core_type = #tpu.core_type<tc>, window_params = [{transform_indices = @transform_0, window_bounds = array<i64: 8, 16, 32>}, {pipeline_mode = #tpu.pipeline_mode<synchronous>, transform_indices = @transform_1, window_bounds = array<i64: 32, 64>}, {pipeline_mode = #tpu.pipeline_mode<synchronous>, transform_indices = @transform_2, window_bounds = array<i64: 1, 64>}, {pipeline_mode = #tpu.pipeline_mode<synchronous>, transform_indices = @transform_3, window_bounds = array<i64: 64, 32>}, {pipeline_mode = #tpu.pipeline_mode<synchronous>, transform_indices = @transform_4, window_bounds = array<i64: 1, 32>}, {transform_indices = @transform_5, window_bounds = array<i64: 8, 16, 32>}, {transform_indices = @transform_6, window_bounds = array<i64: 8, 16, 32>}]} {
    %c0 = arith.constant 0 : index
    %c0_0 = arith.constant 0 : index
    %c0_1 = arith.constant 0 : index
    %0 = vector.load %arg1[%c0, %c0_0, %c0_1] : memref<8x16x32xf32, #tpu.memory_space<vmem>>, vector<8x16x32xf32>
    %1 = vector.shape_cast %0 : vector<8x16x32xf32> to vector<128x32xf32>
    %2 = arith.truncf %1 : vector<128x32xf32> to vector<128x32xbf16>
    %c0_2 = arith.constant 0 : index
    %c0_3 = arith.constant 0 : index
    %3 = vector.load %arg2[%c0_2, %c0_3] : memref<32x64xbf16, #tpu.memory_space<vmem>>, vector<32x64xbf16>
    %cst = arith.constant dense<0.000000e+00> : vector<128x64xf32>
    %4 = tpu.matmul %2, %3, %cst {dimension_numbers = #tpu.dot_dimension_numbers<[1], [0], [0], [1], [0, 0, 1, 1], [], []>} : vector<128x32xbf16>, vector<32x64xbf16>, vector<128x64xf32> -> vector<128x64xf32>
    %c0_4 = arith.constant 0 : index
    %c0_5 = arith.constant 0 : index
    %5 = vector.load %arg3[%c0_4, %c0_5] : memref<1x64xf32, #tpu.memory_space<vmem>>, vector<1x64xf32>
    %6 = vector.broadcast %5 : vector<1x64xf32> to vector<128x64xf32>
    %7 = arith.addf %4, %6 : vector<128x64xf32>
    %8 = vector.shape_cast %7 : vector<128x64xf32> to vector<8x16x64xf32>
    %cst_6 = arith.constant dense<0.000000e+00> : vector<8x64xf32>
    %9 = vector.multi_reduction <add>, %8, %cst_6 [1] : vector<8x16x64xf32> to vector<8x64xf32>
    %10 = vector.shape_cast %9 : vector<8x64xf32> to vector<8x1x64xf32>
    %11 = arith.mulf %8, %8 : vector<8x16x64xf32>
    %cst_7 = arith.constant dense<0.000000e+00> : vector<8x64xf32>
    %12 = vector.multi_reduction <add>, %11, %cst_7 [1] : vector<8x16x64xf32> to vector<8x64xf32>
    %13 = vector.shape_cast %12 : vector<8x64xf32> to vector<8x1x64xf32>
    %cst_8 = arith.constant 6.250000e-02 : f32
    %14 = vector.broadcast %cst_8 : f32 to vector<8x1x64xf32>
    %15 = arith.mulf %10, %14 : vector<8x1x64xf32>
    %cst_9 = arith.constant 6.250000e-02 : f32
    %16 = vector.broadcast %cst_9 : f32 to vector<8x1x64xf32>
    %17 = arith.mulf %13, %16 : vector<8x1x64xf32>
    %18 = arith.mulf %15, %15 : vector<8x1x64xf32>
    %19 = arith.subf %17, %18 : vector<8x1x64xf32>
    %cst_10 = arith.constant 0.000000e+00 : f32
    %20 = vector.broadcast %cst_10 : f32 to vector<8x1x64xf32>
    %21 = arith.maximumf %19, %20 : vector<8x1x64xf32>
    %22 = vector.broadcast %15 : vector<8x1x64xf32> to vector<8x16x64xf32>
    %23 = arith.subf %8, %22 : vector<8x16x64xf32>
    %cst_11 = arith.constant 9.99999974E-6 : f32
    %24 = vector.broadcast %cst_11 : f32 to vector<8x1x64xf32>
    %25 = arith.addf %21, %24 : vector<8x1x64xf32>
    %26 = math.rsqrt %25 : vector<8x1x64xf32>
    %27 = vector.broadcast %26 : vector<8x1x64xf32> to vector<8x16x64xf32>
    %28 = arith.mulf %23, %27 : vector<8x16x64xf32>
    %cst_12 = arith.constant 0.000000e+00 : f32
    %29 = vector.broadcast %cst_12 : f32 to vector<8x16x64xf32>
    %30 = arith.maximumf %28, %29 : vector<8x16x64xf32>
    %31 = vector.shape_cast %30 : vector<8x16x64xf32> to vector<128x64xf32>
    %32 = arith.truncf %31 : vector<128x64xf32> to vector<128x64xbf16>
    %c0_13 = arith.constant 0 : index
    %c0_14 = arith.constant 0 : index
    %33 = vector.load %arg4[%c0_13, %c0_14] : memref<64x32xbf16, #tpu.memory_space<vmem>>, vector<64x32xbf16>
    %cst_15 = arith.constant dense<0.000000e+00> : vector<128x32xf32>
    %34 = tpu.matmul %32, %33, %cst_15 {dimension_numbers = #tpu.dot_dimension_numbers<[1], [0], [0], [1], [0, 0, 1, 1], [], []>} : vector<128x64xbf16>, vector<64x32xbf16>, vector<128x32xf32> -> vector<128x32xf32>
    %c0_16 = arith.constant 0 : index
    %c0_17 = arith.constant 0 : index
    %35 = vector.load %arg5[%c0_16, %c0_17] : memref<1x32xf32, #tpu.memory_space<vmem>>, vector<1x32xf32>
    %36 = vector.broadcast %35 : vector<1x32xf32> to vector<128x32xf32>
    %37 = arith.addf %34, %36 : vector<128x32xf32>
    %38 = arith.negf %37 : vector<128x32xf32>
    %39 = math.exp %38 : vector<128x32xf32>
    %cst_18 = arith.constant 1.000000e+00 : f32
    %40 = vector.broadcast %cst_18 : f32 to vector<128x32xf32>
    %41 = arith.addf %40, %39 : vector<128x32xf32>
    %42 = arith.divf %40, %41 : vector<128x32xf32>
    %43 = vector.shape_cast %42 : vector<128x32xf32> to vector<8x16x32xf32>
    %c0_19 = arith.constant 0 : index
    %c0_20 = arith.constant 0 : index
    %c0_21 = arith.constant 0 : index
    %44 = vector.load %arg7[%c0_19, %c0_20, %c0_21] : memref<8x16x32xf32, #tpu.memory_space<vmem>>, vector<8x16x32xf32>
    tpu.vector_store %arg7[%c0_19, %c0_20, %c0_21], %43 {strides = array<i32>} : memref<8x16x32xf32, #tpu.memory_space<vmem>>, vector<8x16x32xf32>,
    %45 = arith.mulf %0, %43 : vector<8x16x32xf32>
    %c0_22 = arith.constant 0 : index
    %c0_23 = arith.constant 0 : index
    %c0_24 = arith.constant 0 : index
    %46 = vector.load %arg6[%c0_22, %c0_23, %c0_24] : memref<8x16x32xf32, #tpu.memory_space<vmem>>, vector<8x16x32xf32>
    tpu.vector_store %arg6[%c0_22, %c0_23, %c0_24], %45 {strides = array<i32>} : memref<8x16x32xf32, #tpu.memory_space<vmem>>, vector<8x16x32xf32>,
    return
  }
  func.func @transform_0(%arg0: i32) -> (i32, i32, i32) {
    %c0_i32 = arith.constant 0 : i32
    %c0_i32_0 = arith.constant 0 : i32
    %c0_i32_1 = arith.constant 0 : i32
    return %arg0, %c0_i32, %c0_i32_0 : i32, i32, i32
  }
  func.func @transform_1(%arg0: i32) -> (i32, i32) {
    %c0_i32 = arith.constant 0 : i32
    %c0_i32_0 = arith.constant 0 : i32
    %c0_i32_1 = arith.constant 0 : i32
    return %c0_i32, %c0_i32_0 : i32, i32
  }
  func.func @transform_2(%arg0: i32) -> (i32, i32) {
    %c0_i32 = arith.constant 0 : i32
    %c0_i32_0 = arith.constant 0 : i32
    %c0_i32_1 = arith.constant 0 : i32
    return %c0_i32, %c0_i32_0 : i32, i32
  }
  func.func @transform_3(%arg0: i32) -> (i32, i32) {
    %c0_i32 = arith.constant 0 : i32
    %c0_i32_0 = arith.constant 0 : i32
    %c0_i32_1 = arith.constant 0 : i32
    return %c0_i32, %c0_i32_0 : i32, i32
  }
  func.func @transform_4(%arg0: i32) -> (i32, i32) {
    %c0_i32 = arith.constant 0 : i32
    %c0_i32_0 = arith.constant 0 : i32
    %c0_i32_1 = arith.constant 0 : i32
    return %c0_i32, %c0_i32_0 : i32, i32
  }
  func.func @transform_5(%arg0: i32) -> (i32, i32, i32) {
    %c0_i32 = arith.constant 0 : i32
    %c0_i32_0 = arith.constant 0 : i32
    %c0_i32_1 = arith.constant 0 : i32
    return %arg0, %c0_i32, %c0_i32_0 : i32, i32, i32
  }
  func.func @transform_6(%arg0: i32) -> (i32, i32, i32) {
    %c0_i32 = arith.constant 0 : i32
    %c0_i32_0 = arith.constant 0 : i32
    %c0_i32_1 = arith.constant 0 : i32
    return %arg0, %c0_i32, %c0_i32_0 : i32, i32, i32
  }
}

</mosaic_0001>

<llo_original>
// kernel: tpu_custom_call.1
$region0: #{tpu_custom_call.1}
  #allocation0 [shape = 'u32[]', space=smem, size = 0x4, offset = 0x4, fixed_abs, tag = 'smem constant byte address 0x4 - core index']
  #allocation1 [shape = 'u32[72,128]{1,0:T(1,128)}', space=vmem, size = 0x9000, scoped, tag = 'internal scratch']
  %s0 = inlined_call_operand.hbm [shape: f32[16,16,32], index: 0, kind: input, shape index: {}]
  %s1 = inlined_call_operand.vmem [shape: bf16[32,64], index: 1, kind: input, shape index: {}]
  %s2 = inlined_call_operand.vmem [shape: f32[1,64], index: 2, kind: input, shape index: {}]
  %s3 = inlined_call_operand.vmem [shape: bf16[64,32], index: 3, kind: input, shape index: {}]
  %s4 = inlined_call_operand.vmem [shape: f32[1,32], index: 4, kind: input, shape index: {}]
  %s5 = inlined_call_operand.hbm [shape: f32[16,16,32], index: 5, kind: output, shape index: {0}]
  %s6 = inlined_call_operand.hbm [shape: f32[16,16,32], index: 6, kind: output, shape index: {1}]
  %7 = xla_tuple %s5, %s6
  %s8 = sld [smem:[#allocation0]]
  $region65: #{tpu_custom_call.1} parent=0
    _
  %s10 = ssub.s32 1, %s8
  %s11 = scalar_select 0, %s10, %s8
  $region1: #{tpu_custom_call.1} parent=0
    #allocation2 [shape = 'u8[131072]{0}', space=vmem, size = 0x20000, scoped, tag = 'input window, operand 0']
    #allocation3 [shape = 's32[2]{0}', space=sflag, size = 0x8, scoped, tag = 'scoped memory for tpu_custom_call.1']
    #allocation4 [shape = 's32[2]{0}', space=sflag, size = 0x8, scoped, tag = 'scoped memory for tpu_custom_call.1']
    #allocation5 [shape = 'u8[131072]{0}', space=vmem, size = 0x20000, scoped, tag = 'output window, operand 0']
    #allocation6 [shape = 'u8[131072]{0}', space=vmem, size = 0x20000, scoped, tag = 'output window, operand 1']
    #allocation7 [shape = 's32[2]{0}', space=sflag, size = 0x8, scoped, tag = 'scoped memory for tpu_custom_call.1']
    %12 = vsyncpa [#allocation3], 0
    %s13 = scalar_lea.sflag [#allocation3], 1
    %14 = vsyncpa %s13, 0
    %15 = vsyncpa [#allocation4], 0
    %s16 = scalar_lea.sflag [#allocation4], 1
    %17 = vsyncpa %s16, 0
    %18 = vsyncpa [#allocation7], 0
    %s19 = scalar_lea.sflag [#allocation7], 1
    %20 = vsyncpa %s19, 0
    loop: start=0, step=1, limit=4
    $region2: #{tpu_custom_call.1} parent=1 // loop_pre_header
      _
    $region3: #{tpu_custom_call.1} parent=1 // loop_header
      %s22 = sphi 0, %s26
      %p23 = scmp.ge.s32.totalorder %s22, 4
      %s32 = sphi 0, %s34
      %s35 = sphi 0, %s32
      %s36 = sphi 0, %s35
      %s52 = sphi 0, %s36
      %s56 = sphi 0, %s56
      %s58 = sphi 0, %s56
      %s59 = sphi 0, %s58
      %s73 = sphi 0, %s59
      %s77 = sphi 0, %s77
      %s79 = sphi 0, %s77
      %s80 = sphi 0, %s79
      %s94 = sphi 0, %s80
      %s98 = sphi 0, %s98
      %s100 = sphi 0, %s98
      %s101 = sphi 0, %s100
      %s115 = sphi 0, %s101
      %s119 = sphi 0, %s119
      %s121 = sphi 0, %s119
      %s122 = sphi 0, %s121
      %s136 = sphi 0, %s122
      %s142 = sphi 0, %s144
      %s145 = sphi 0, %s142
      %s146 = sphi 0, %s145
      %s162 = sphi 0, %s146
      %s168 = sphi 0, %s170
      %s171 = sphi 0, %s168
      %s172 = sphi 0, %s171
      %s188 = sphi 0, %s172
    $region4: #{tpu_custom_call.1} parent=1 // loop_header_branch
      %25 = sbr.rel (%p23) target = $region8
    $region5: #{tpu_custom_call.1} parent=1 // loop_body
      %s27 = ssub.s32 %s22, 1
      %s28 = ssub.s32 %s22, 2
      %s29 = sadd.s32 %s22, 1
      %s30 = ssub.s32 %s22, %s29
      %p31 = scmp.eq.s32.totalorder %s30, 0
      %s33 = sadd.s32 %s32, 1
      %s34 = scalar_select %p31, %s32, %s33
      %p37 = pneg %p31
      %p38 = scmp.eq.s32.totalorder %s22, 1
      %p39 = por %p37, %p38
      %p40 = scmp.ne.s32.totalorder %s32, %s35
      %p41 = scmp.eq.s32.totalorder %s22, 0
      %p42 = por %p40, %p41
      %p43 = scmp.ne.s32.totalorder %s32, %s35
      %p44 = scmp.eq.s32.totalorder %s27, 1
      %p45 = por %p43, %p44
      %p46 = scmp.ne.s32.totalorder %s35, %s36
      %p47 = scmp.eq.s32.totalorder %s27, 0
      %p48 = por %p46, %p47
      %p49 = scmp.ne.s32.totalorder %s35, %s36
      %p50 = scmp.eq.s32.totalorder %s28, 1
      %p51 = por %p49, %p50
      %p53 = scmp.ne.s32.totalorder %s36, %s52
      %p54 = scmp.eq.s32.totalorder %s28, 0
      %p55 = por %p53, %p54
      %s57 = sadd.s32 %s56, 1
      %p60 = scmp.eq.s32.totalorder %s22, 1
      %p61 = scmp.ne.s32.totalorder %s56, %s58
      %p62 = scmp.eq.s32.totalorder %s22, 0
      %p63 = por %p61, %p62
      %p64 = scmp.ne.s32.totalorder %s56, %s58
      %p65 = scmp.eq.s32.totalorder %s27, 1
      %p66 = por %p64, %p65
      %p67 = scmp.ne.s32.totalorder %s58, %s59
      %p68 = scmp.eq.s32.totalorder %s27, 0
      %p69 = por %p67, %p68
      %p70 = scmp.ne.s32.totalorder %s58, %s59
      %p71 = scmp.eq.s32.totalorder %s28, 1
      %p72 = por %p70, %p71
      %p74 = scmp.ne.s32.totalorder %s59, %s73
      %p75 = scmp.eq.s32.totalorder %s28, 0
      %p76 = por %p74, %p75
      %s78 = sadd.s32 %s77, 1
      %p81 = scmp.eq.s32.totalorder %s22, 1
      %p82 = scmp.ne.s32.totalorder %s77, %s79
      %p83 = scmp.eq.s32.totalorder %s22, 0
      %p84 = por %p82, %p83
      %p85 = scmp.ne.s32.totalorder %s77, %s79
      %p86 = scmp.eq.s32.totalorder %s27, 1
      %p87 = por %p85, %p86
      %p88 = scmp.ne.s32.totalorder %s79, %s80
      %p89 = scmp.eq.s32.totalorder %s27, 0
      %p90 = por %p88, %p89
      %p91 = scmp.ne.s32.totalorder %s79, %s80
      %p92 = scmp.eq.s32.totalorder %s28, 1
      %p93 = por %p91, %p92
      %p95 = scmp.ne.s32.totalorder %s80, %s94
      %p96 = scmp.eq.s32.totalorder %s28, 0
      %p97 = por %p95, %p96
      %s99 = sadd.s32 %s98, 1
      %p102 = scmp.eq.s32.totalorder %s22, 1
      %p103 = scmp.ne.s32.totalorder %s98, %s100
      %p104 = scmp.eq.s32.totalorder %s22, 0
      %p105 = por %p103, %p104
      %p106 = scmp.ne.s32.totalorder %s98, %s100
      %p107 = scmp.eq.s32.totalorder %s27, 1
      %p108 = por %p106, %p107
      %p109 = scmp.ne.s32.totalorder %s100, %s101
      %p110 = scmp.eq.s32.totalorder %s27, 0
      %p111 = por %p109, %p110
      %p112 = scmp.ne.s32.totalorder %s100, %s101
      %p113 = scmp.eq.s32.totalorder %s28, 1
      %p114 = por %p112, %p113
      %p116 = scmp.ne.s32.totalorder %s101, %s115
      %p117 = scmp.eq.s32.totalorder %s28, 0
      %p118 = por %p116, %p117
      %s120 = sadd.s32 %s119, 1
      %p123 = scmp.eq.s32.totalorder %s22, 1
      %p124 = scmp.ne.s32.totalorder %s119, %s121
      %p125 = scmp.eq.s32.totalorder %s22, 0
      %p126 = por %p124, %p125
      %p127 = scmp.ne.s32.totalorder %s119, %s121
      %p128 = scmp.eq.s32.totalorder %s27, 1
      %p129 = por %p127, %p128
      %p130 = scmp.ne.s32.totalorder %s121, %s122
      %p131 = scmp.eq.s32.totalorder %s27, 0
      %p132 = por %p130, %p131
      %p133 = scmp.ne.s32.totalorder %s121, %s122
      %p134 = scmp.eq.s32.totalorder %s28, 1
      %p135 = por %p133, %p134
      %p137 = scmp.ne.s32.totalorder %s122, %s136
      %p138 = scmp.eq.s32.totalorder %s28, 0
      %p139 = por %p137, %p138
      %s140 = ssub.s32 %s22, %s29
      %p141 = scmp.eq.s32.totalorder %s140, 0
      %s143 = sadd.s32 %s142, 1
      %s144 = scalar_select %p141, %s142, %s143
      %p147 = pneg %p141
      %p148 = scmp.eq.s32.totalorder %s22, 1
      %p149 = por %p147, %p148
      %p150 = scmp.ne.s32.totalorder %s142, %s145
      %p151 = scmp.eq.s32.totalorder %s22, 0
      %p152 = por %p150, %p151
      %p153 = scmp.ne.s32.totalorder %s142, %s145
      %p154 = scmp.eq.s32.totalorder %s27, 1
      %p155 = por %p153, %p154
      %p156 = scmp.ne.s32.totalorder %s145, %s146
      %p157 = scmp.eq.s32.totalorder %s27, 0
      %p158 = por %p156, %p157
      %p159 = scmp.ne.s32.totalorder %s145, %s146
      %p160 = scmp.eq.s32.totalorder %s28, 1
      %p161 = por %p159, %p160
      %p163 = scmp.ne.s32.totalorder %s146, %s162
      %p164 = scmp.eq.s32.totalorder %s28, 0
      %p165 = por %p163, %p164
      %s166 = ssub.s32 %s22, %s29
      %p167 = scmp.eq.s32.totalorder %s166, 0
      %s169 = sadd.s32 %s168, 1
      %s170 = scalar_select %p167, %s168, %s169
      %p173 = pneg %p167
      %p174 = scmp.eq.s32.totalorder %s22, 1
      %p175 = por %p173, %p174
      %p176 = scmp.ne.s32.totalorder %s168, %s171
      %p177 = scmp.eq.s32.totalorder %s22, 0
      %p178 = por %p176, %p177
      %p179 = scmp.ne.s32.totalorder %s168, %s171
      %p180 = scmp.eq.s32.totalorder %s27, 1
      %p181 = por %p179, %p180
      %p182 = scmp.ne.s32.totalorder %s171, %s172
      %p183 = scmp.eq.s32.totalorder %s27, 0
      %p184 = por %p182, %p183
      %p185 = scmp.ne.s32.totalorder %s171, %s172
      %p186 = scmp.eq.s32.totalorder %s28, 1
      %p187 = por %p185, %p186
      %p189 = scmp.ne.s32.totalorder %s172, %s188
      %p190 = scmp.eq.s32.totalorder %s28, 0
      %p191 = por %p189, %p190
      %p192 = scmp.le.s32.totalorder 1, %s22
      %p193 = scmp.lt.s32.totalorder %s22, 3
      %p194 = pnand %p192, %p193
      %p195 = pneg %p194
      // Predicated region
      $region9: #{tpu_custom_call.1} parent=5 // pred_check
        _
      $region10: #{tpu_custom_call.1} parent=5 // pred_check_branch
        %197 = sbr.rel (%p194) target = $region12
      $region11: #{tpu_custom_call.1} parent=5 // pred_region
        %s198 = ssub.s32 %s22, 1
        // Predicated region
        $region13: #{tpu_custom_call.1} parent=11 // pred_check
          %p199 = pneg %p69
        $region14: #{tpu_custom_call.1} parent=11 // pred_check_branch
          %201 = sbr.rel (%p199) target = $region16
        $region15: #{tpu_custom_call.1} parent=11 // pred_region
          _
        $region16: #{tpu_custom_call.1} parent=11 // pred_fallthru
          _
        // Predicated region
        $region17: #{tpu_custom_call.1} parent=11 // pred_check
          %p202 = pneg %p90
        $region18: #{tpu_custom_call.1} parent=11 // pred_check_branch
          %204 = sbr.rel (%p202) target = $region20
        $region19: #{tpu_custom_call.1} parent=11 // pred_region
          _
        $region20: #{tpu_custom_call.1} parent=11 // pred_fallthru
          _
        // Predicated region
        $region21: #{tpu_custom_call.1} parent=11 // pred_check
          %p205 = pneg %p111
        $region22: #{tpu_custom_call.1} parent=11 // pred_check_branch
          %207 = sbr.rel (%p205) target = $region24
        $region23: #{tpu_custom_call.1} parent=11 // pred_region
          _
        $region24: #{tpu_custom_call.1} parent=11 // pred_fallthru
          _
        // Predicated region
        $region25: #{tpu_custom_call.1} parent=11 // pred_check
          %p208 = pneg %p132
        $region26: #{tpu_custom_call.1} parent=11 // pred_check_branch
          %210 = sbr.rel (%p208) target = $region28
        $region27: #{tpu_custom_call.1} parent=11 // pred_region
          _
        $region28: #{tpu_custom_call.1} parent=11 // pred_fallthru
          _
      $region12: #{tpu_custom_call.1} parent=5 // pred_fallthru
        _
      %p211 = scmp.lt.s32.totalorder %s22, 2
      // Predicated region
      $region29: #{tpu_custom_call.1} parent=5 // pred_check
        %p212 = pneg %p211
      $region30: #{tpu_custom_call.1} parent=5 // pred_check_branch
        %214 = sbr.rel (%p212) target = $region32
      $region31: #{tpu_custom_call.1} parent=5 // pred_region
        // Predicated region
        $region33: #{tpu_custom_call.1} parent=31 // pred_check
          %p215 = pneg %p42
        $region34: #{tpu_custom_call.1} parent=31 // pred_check_branch
          %217 = sbr.rel (%p215) target = $region36
        $region35: #{tpu_custom_call.1} parent=31 // pred_region
          %s218 = sand.u32 %s32, 1
          %s219 = scalar_lea.sflag [#allocation3], %s218
          %s220 = sand.u32 %s32, 1
          %s221 = smul.addr %s220, 128
          %s222 = scalar_lea.vmem [#allocation2], %s221
          %s223 = smul.u32 8, %s22
          %225 = vsyncadd %s219, 0
          %s226 = smul.addr %s223, 2
          %s227 = smul.addr %s226, 8
          %s228 = scalar_lea.hbm %s0, %s227
          %s229 = sshll.u32 %s228, 4
          %s230 = int_to_ptr.hbm [resolvable:$true] %s229
          %s231 = sshll.u32 %s222, 4
          %s232 = int_to_ptr.vmem [resolvable:$true] %s231
          %237 = dma.hbm_to_vmem [thread:$0]  %s230, 2048, %s232, %s219, 128, 128, 8
        $region36: #{tpu_custom_call.1} parent=31 // pred_fallthru
          _
      $region32: #{tpu_custom_call.1} parent=5 // pred_fallthru
        _
      %p238 = scmp.le.s32.totalorder 1, %s22
      %p239 = scmp.lt.s32.totalorder %s22, 3
      %p240 = pnand %p238, %p239
      %p241 = pneg %p240
      // Predicated region
      $region37: #{tpu_custom_call.1} parent=5 // pred_check
        _
      $region38: #{tpu_custom_call.1} parent=5 // pred_check_branch
        %243 = sbr.rel (%p240) target = $region40
      $region39: #{tpu_custom_call.1} parent=5 // pred_region
        %s244 = ssub.s32 %s22, 1
        %s245 = sand.u32 %s35, 1
        %s246 = scalar_lea.sflag [#allocation3], %s245
        %s247 = sand.u32 %s35, 1
        %s248 = smul.addr %s247, 128
        %s249 = scalar_lea.vmem [#allocation2], %s248
        // Predicated region
        $region41: #{tpu_custom_call.1} parent=39 // pred_check
          %p250 = pneg %p48
        $region42: #{tpu_custom_call.1} parent=39 // pred_check_branch
          %252 = sbr.rel (%p250) target = $region44
        $region43: #{tpu_custom_call.1} parent=39 // pred_region
          %254 = dma.done %s246, 2048
        $region44: #{tpu_custom_call.1} parent=39 // pred_fallthru
          _
        %s255 = sand.u32 %s35, 1
        %s256 = scalar_lea.sflag [#allocation3], %s255
        %s257 = sand.u32 %s35, 1
        %s258 = smul.addr %s257, 128
        %s259 = scalar_lea.vmem [#allocation2], %s258
        %p260 = pneg %p48
        %p261 = pneg %p45
        %p262 = pneg %p69
        %p263 = pneg %p66
        %p264 = pneg %p90
        %p265 = pneg %p87
        %p266 = pneg %p111
        %p267 = pneg %p108
        %p268 = pneg %p132
        %p269 = pneg %p129
        %p270 = pneg %p158
        %p271 = pneg %p155
        %s272 = sand.u32 %s145, 1
        %s273 = scalar_lea.sflag [#allocation4], %s272
        %s274 = sand.u32 %s145, 1
        %s275 = smul.addr %s274, 128
        %s276 = scalar_lea.vmem [#allocation5], %s275
        %p277 = pneg %p184
        %p278 = pneg %p181
        %s279 = sand.u32 %s171, 1
        %s280 = scalar_lea.sflag [#allocation7], %s279
        %s281 = sand.u32 %s171, 1
        %s282 = smul.addr %s281, 128
        %s283 = scalar_lea.vmem [#allocation6], %s282
        %s284 = smul.u32 8, %s27
        %s285 = smul.u32 8, %s27
        %s286 = smul.u32 8, %s27
        %v288 = vld [vmem:[%s249] sm:$0xff]
        %v289 = vld [vmem:[%s249 + $0x8] sm:$0xff]
        %v290 = vld [vmem:[%s249 + $0x10] sm:$0xff]
        %v291 = vld [vmem:[%s249 + $0x18] sm:$0xff]
        %v292 = vld [vmem:[%s249 + $0x20] sm:$0xff]
        %v293 = vld [vmem:[%s249 + $0x28] sm:$0xff]
        %v294 = vld [vmem:[%s249 + $0x30] sm:$0xff]
        %v295 = vld [vmem:[%s249 + $0x38] sm:$0xff]
        %v296 = vld [vmem:[%s249 + $0x40] sm:$0xff]
        %v297 = vld [vmem:[%s249 + $0x48] sm:$0xff]
        %v298 = vld [vmem:[%s249 + $0x50] sm:$0xff]
        %v299 = vld [vmem:[%s249 + $0x58] sm:$0xff]
        %v300 = vld [vmem:[%s249 + $0x60] sm:$0xff]
        %v301 = vld [vmem:[%s249 + $0x68] sm:$0xff]
        %v302 = vld [vmem:[%s249 + $0x70] sm:$0xff]
        %v303 = vld [vmem:[%s249 + $0x78] sm:$0xff]
        %v304 = vpack.c.bf16 %v289, %v288
        %v305 = vpack.c.bf16 %v291, %v290
        %v306 = vpack.c.bf16 %v293, %v292
        %v307 = vpack.c.bf16 %v295, %v294
        %v308 = vpack.c.bf16 %v297, %v296
        %v309 = vpack.c.bf16 %v299, %v298
        %v310 = vpack.c.bf16 %v301, %v300
        %v311 = vpack.c.bf16 %v303, %v302
        %v312 = vld [vmem:[%s1] sm:$0xf]
        %v313 = vld [vmem:[%s1 + $0x4] sm:$0xf]
        %v314 = vld [vmem:[%s1 + $0x8] sm:$0xf]
        %v315 = vld [vmem:[%s1 + $0xc] sm:$0xf]
        %v316 = vld [vmem:[%s2] sm:$0x1]
        %v318 = vperm.slane %v316, 0
        %v324 = vunpack.c.l.b16 %v312
        %v325 = vunpack.c.l.b16 %v313
        %v326 = vunpack.c.l.b16 %v314
        %v327 = vunpack.c.l.b16 %v315
        %v328 = vpack.c.b16 %v325, %v324
        %v329 = vpack.c.b16 %v327, %v326
        %vm332 = vcmask 261120
        %v334 = vsel %vm332, %v304, 0
        %v337 = vsel %vm332, %v305, 0
        %v340 = vsel %vm332, %v306, 0
        %v343 = vsel %vm332, %v307, 0
        %v346 = vsel %vm332, %v308, 0
        %v349 = vsel %vm332, %v309, 0
        %v352 = vsel %vm332, %v310, 0
        %v355 = vsel %vm332, %v311, 0
        %357 = vmatpush.bf16.msra.mxu0 0
        %358 = vmatpush.bf16.msra.mxu0 0
        %359 = vmatpush.bf16.msra.mxu0 0
        %360 = vmatpush.bf16.msra.mxu0 0
        %361 = vmatpush.bf16.msra.mxu0 0
        %362 = vmatpush.bf16.msra.mxu0 0
        %363 = vmatpush.bf16.msra.mxu0 %v329
        %364 = vmatpush.bf16.msra.mxu0 %v328
        %365 = vmatmul.bf16.gmra.mxu0 %v334
        %v366 = vpop.f32.mrf.mxu0
        %v367 = vadd.f32 %v318, %v366
        %v368 = vpop.f32.mrf.mxu0
        %v369 = vadd.f32 %v318, %v368
        %370 = vmatmul.bf16.gmra.mxu0 %v337
        %v371 = vpop.f32.mrf.mxu0
        %v372 = vadd.f32 %v318, %v371
        %v373 = vpop.f32.mrf.mxu0
        %v374 = vadd.f32 %v318, %v373
        %375 = vmatmul.bf16.gmra.mxu0 %v340
        %v376 = vpop.f32.mrf.mxu0
        %v377 = vadd.f32 %v318, %v376
        %v378 = vpop.f32.mrf.mxu0
        %v379 = vadd.f32 %v318, %v378
        %380 = vmatmul.bf16.gmra.mxu0 %v343
        %v381 = vpop.f32.mrf.mxu0
        %v382 = vadd.f32 %v318, %v381
        %v383 = vpop.f32.mrf.mxu0
        %v384 = vadd.f32 %v318, %v383
        %385 = vmatmul.bf16.gmra.mxu0 %v346
        %v386 = vpop.f32.mrf.mxu0
        %v387 = vadd.f32 %v318, %v386
        %v388 = vpop.f32.mrf.mxu0
        %v389 = vadd.f32 %v318, %v388
        %390 = vmatmul.bf16.gmra.mxu0 %v349
        %v391 = vpop.f32.mrf.mxu0
        %v392 = vadd.f32 %v318, %v391
        %v393 = vpop.f32.mrf.mxu0
        %v394 = vadd.f32 %v318, %v393
        %395 = vmatmul.bf16.gmra.mxu0 %v352
        %v396 = vpop.f32.mrf.mxu0
        %v397 = vadd.f32 %v318, %v396
        %v398 = vpop.f32.mrf.mxu0
        %v399 = vadd.f32 %v318, %v398
        %400 = vmatmul.bf16.gmra.mxu0 %v355
        %v401 = vpop.f32.mrf.mxu0
        %v402 = vadd.f32 %v318, %v401
        %v403 = vpop.f32.mrf.mxu0
        %v404 = vadd.f32 %v318, %v403
        %405 = vdwg.mxu0
        %vm406 = vcmask 523264
        %v407 = vsel %vm406, %v367, 0.0
        %v408 = vsel %vm406, %v369, 0.0
        %v409 = vadd.f32 %v407, %v408
        %v410 = vrot.slane %v409, 4
        %v411 = vadd.f32 %v409, %v410
        %v412 = vrot.slane %v411, 2
        %v413 = vadd.f32 %v411, %v412
        %v414 = vrot.slane %v413, 1
        %v415 = vadd.f32 %v413, %v414
        %v416 = vsel %vm406, %v372, 0.0
        %v417 = vsel %vm406, %v374, 0.0
        %v418 = vadd.f32 %v416, %v417
        %v419 = vrot.slane %v418, 4
        %v420 = vadd.f32 %v418, %v419
        %v421 = vrot.slane %v420, 2
        %v422 = vadd.f32 %v420, %v421
        %v423 = vrot.slane %v422, 1
        %v424 = vadd.f32 %v422, %v423
        %v425 = vsel %vm406, %v377, 0.0
        %v426 = vsel %vm406, %v379, 0.0
        %v427 = vadd.f32 %v425, %v426
        %v428 = vrot.slane %v427, 4
        %v429 = vadd.f32 %v427, %v428
        %v430 = vrot.slane %v429, 2
        %v431 = vadd.f32 %v429, %v430
        %v432 = vrot.slane %v431, 1
        %v433 = vadd.f32 %v431, %v432
        %v434 = vsel %vm406, %v382, 0.0
        %v435 = vsel %vm406, %v384, 0.0
        %v436 = vadd.f32 %v434, %v435
        %v437 = vrot.slane %v436, 4
        %v438 = vadd.f32 %v436, %v437
        %v439 = vrot.slane %v438, 2
        %v440 = vadd.f32 %v438, %v439
        %v441 = vrot.slane %v440, 1
        %v442 = vadd.f32 %v440, %v441
        %v443 = vsel %vm406, %v387, 0.0
        %v444 = vsel %vm406, %v389, 0.0
        %v445 = vadd.f32 %v443, %v444
        %v446 = vrot.slane %v445, 4
        %v447 = vadd.f32 %v445, %v446
        %v448 = vrot.slane %v447, 2
        %v449 = vadd.f32 %v447, %v448
        %v450 = vrot.slane %v449, 1
        %v451 = vadd.f32 %v449, %v450
        %v452 = vsel %vm406, %v392, 0.0
        %v453 = vsel %vm406, %v394, 0.0
        %v454 = vadd.f32 %v452, %v453
        %v455 = vrot.slane %v454, 4
        %v456 = vadd.f32 %v454, %v455
        %v457 = vrot.slane %v456, 2
        %v458 = vadd.f32 %v456, %v457
        %v459 = vrot.slane %v458, 1
        %v460 = vadd.f32 %v458, %v459
        %v461 = vsel %vm406, %v397, 0.0
        %v462 = vsel %vm406, %v399, 0.0
        %v463 = vadd.f32 %v461, %v462
        %v464 = vrot.slane %v463, 4
        %v465 = vadd.f32 %v463, %v464
        %v466 = vrot.slane %v465, 2
        %v467 = vadd.f32 %v465, %v466
        %v468 = vrot.slane %v467, 1
        %v469 = vadd.f32 %v467, %v468
        %v470 = vsel %vm406, %v402, 0.0
        %v471 = vsel %vm406, %v404, 0.0
        %v472 = vadd.f32 %v470, %v471
        %v473 = vrot.slane %v472, 4
        %v474 = vadd.f32 %v472, %v473
        %v475 = vrot.slane %v474, 2
        %v476 = vadd.f32 %v474, %v475
        %v477 = vrot.slane %v476, 1
        %v478 = vadd.f32 %v476, %v477
        %v479 = vmul.f32 %v367, %v367
        %v480 = vmul.f32 %v369, %v369
        %v481 = vmul.f32 %v372, %v372
        %v482 = vmul.f32 %v374, %v374
        %v483 = vmul.f32 %v377, %v377
        %v484 = vmul.f32 %v379, %v379
        %v485 = vmul.f32 %v382, %v382
        %v486 = vmul.f32 %v384, %v384
        %v487 = vmul.f32 %v387, %v387
        %v488 = vmul.f32 %v389, %v389
        %v489 = vmul.f32 %v392, %v392
        %v490 = vmul.f32 %v394, %v394
        %v491 = vmul.f32 %v397, %v397
        %v492 = vmul.f32 %v399, %v399
        %v493 = vmul.f32 %v402, %v402
        %v494 = vmul.f32 %v404, %v404
        %v495 = vsel %vm406, %v479, 0.0
        %v496 = vsel %vm406, %v480, 0.0
        %v497 = vadd.f32 %v495, %v496
        %v498 = vrot.slane %v497, 4
        %v499 = vadd.f32 %v497, %v498
        %v500 = vrot.slane %v499, 2
        %v501 = vadd.f32 %v499, %v500
        %v502 = vrot.slane %v501, 1
        %v503 = vadd.f32 %v501, %v502
        %v504 = vsel %vm406, %v481, 0.0
        %v505 = vsel %vm406, %v482, 0.0
        %v506 = vadd.f32 %v504, %v505
        %v507 = vrot.slane %v506, 4
        %v508 = vadd.f32 %v506, %v507
        %v509 = vrot.slane %v508, 2
        %v510 = vadd.f32 %v508, %v509
        %v511 = vrot.slane %v510, 1
        %v512 = vadd.f32 %v510, %v511
        %v513 = vsel %vm406, %v483, 0.0
        %v514 = vsel %vm406, %v484, 0.0
        %v515 = vadd.f32 %v513, %v514
        %v516 = vrot.slane %v515, 4
        %v517 = vadd.f32 %v515, %v516
        %v518 = vrot.slane %v517, 2
        %v519 = vadd.f32 %v517, %v518
        %v520 = vrot.slane %v519, 1
        %v521 = vadd.f32 %v519, %v520
        %v522 = vsel %vm406, %v485, 0.0
        %v523 = vsel %vm406, %v486, 0.0
        %v524 = vadd.f32 %v522, %v523
        %v525 = vrot.slane %v524, 4
        %v526 = vadd.f32 %v524, %v525
        %v527 = vrot.slane %v526, 2
        %v528 = vadd.f32 %v526, %v527
        %v529 = vrot.slane %v528, 1
        %v530 = vadd.f32 %v528, %v529
        %v531 = vsel %vm406, %v487, 0.0
        %v532 = vsel %vm406, %v488, 0.0
        %v533 = vadd.f32 %v531, %v532
        %v534 = vrot.slane %v533, 4
        %v535 = vadd.f32 %v533, %v534
        %v536 = vrot.slane %v535, 2
        %v537 = vadd.f32 %v535, %v536
        %v538 = vrot.slane %v537, 1
        %v539 = vadd.f32 %v537, %v538
        %v540 = vsel %vm406, %v489, 0.0
        %v541 = vsel %vm406, %v490, 0.0
        %v542 = vadd.f32 %v540, %v541
        %v543 = vrot.slane %v542, 4
        %v544 = vadd.f32 %v542, %v543
        %v545 = vrot.slane %v544, 2
        %v546 = vadd.f32 %v544, %v545
        %v547 = vrot.slane %v546, 1
        %v548 = vadd.f32 %v546, %v547
        %v549 = vsel %vm406, %v491, 0.0
        %v550 = vsel %vm406, %v492, 0.0
        %v551 = vadd.f32 %v549, %v550
        %v552 = vrot.slane %v551, 4
        %v553 = vadd.f32 %v551, %v552
        %v554 = vrot.slane %v553, 2
        %v555 = vadd.f32 %v553, %v554
        %v556 = vrot.slane %v555, 1
        %v557 = vadd.f32 %v555, %v556
        %v558 = vsel %vm406, %v493, 0.0
        %v559 = vsel %vm406, %v494, 0.0
        %v560 = vadd.f32 %v558, %v559
        %v561 = vrot.slane %v560, 4
        %v562 = vadd.f32 %v560, %v561
        %v563 = vrot.slane %v562, 2
        %v564 = vadd.f32 %v562, %v563
        %v565 = vrot.slane %v564, 1
        %v566 = vadd.f32 %v564, %v565
        %v567 = vmul.f32 %v415, 0.0625
        %v568 = vmul.f32 %v424, 0.0625
        %v569 = vmul.f32 %v433, 0.0625
        %v570 = vmul.f32 %v442, 0.0625
        %v571 = vmul.f32 %v451, 0.0625
        %v572 = vmul.f32 %v460, 0.0625
        %v573 = vmul.f32 %v469, 0.0625
        %v574 = vmul.f32 %v478, 0.0625
        %v575 = vmul.f32 %v503, 0.0625
        %v576 = vmul.f32 %v512, 0.0625
        %v577 = vmul.f32 %v521, 0.0625
        %v578 = vmul.f32 %v530, 0.0625
        %v579 = vmul.f32 %v539, 0.0625
        %v580 = vmul.f32 %v548, 0.0625
        %v581 = vmul.f32 %v557, 0.0625
        %v582 = vmul.f32 %v566, 0.0625
        %v583 = vmul.f32 %v567, %v567
        %v584 = vmul.f32 %v568, %v568
        %v585 = vmul.f32 %v569, %v569
        %v586 = vmul.f32 %v570, %v570
        %v587 = vmul.f32 %v571, %v571
        %v588 = vmul.f32 %v572, %v572
        %v589 = vmul.f32 %v573, %v573
        %v590 = vmul.f32 %v574, %v574
        %v591 = vsub.f32 %v575, %v583
        %v592 = vsub.f32 %v576, %v584
        %v593 = vsub.f32 %v577, %v585
        %v594 = vsub.f32 %v578, %v586
        %v595 = vsub.f32 %v579, %v587
        %v596 = vsub.f32 %v580, %v588
        %v597 = vsub.f32 %v581, %v589
        %v598 = vsub.f32 %v582, %v590
        %v599 = vmax.f32 %v591, 0.0
        %v600 = vmax.f32 %v592, 0.0
        %v601 = vmax.f32 %v593, 0.0
        %v602 = vmax.f32 %v594, 0.0
        %v603 = vmax.f32 %v595, 0.0
        %v604 = vmax.f32 %v596, 0.0
        %v605 = vmax.f32 %v597, 0.0
        %v606 = vmax.f32 %v598, 0.0
        %v607 = vsub.f32 %v367, %v567
        %v608 = vsub.f32 %v369, %v567
        %v609 = vsub.f32 %v372, %v568
        %v610 = vsub.f32 %v374, %v568
        %v611 = vsub.f32 %v377, %v569
        %v612 = vsub.f32 %v379, %v569
        %v613 = vsub.f32 %v382, %v570
        %v614 = vsub.f32 %v384, %v570
        %v615 = vsub.f32 %v387, %v571
        %v616 = vsub.f32 %v389, %v571
        %v617 = vsub.f32 %v392, %v572
        %v618 = vsub.f32 %v394, %v572
        %v619 = vsub.f32 %v397, %v573
        %v620 = vsub.f32 %v399, %v573
        %v621 = vsub.f32 %v402, %v574
        %v622 = vsub.f32 %v404, %v574
        %v623 = vadd.f32 %v599, 1e-05
        %v624 = vadd.f32 %v600, 1e-05
        %v625 = vadd.f32 %v601, 1e-05
        %v626 = vadd.f32 %v602, 1e-05
        %v627 = vadd.f32 %v603, 1e-05
        %v628 = vadd.f32 %v604, 1e-05
        %v629 = vadd.f32 %v605, 1e-05
        %v630 = vadd.f32 %v606, 1e-05
        %v631 = vrsqrt.pop %v623
        %v632 = vmul.f32 %v631, %v623
        %v633 = vmul.f32 %v632, %v631
        %v634 = vmul.f32 0.5, %v633
        %v635 = vsub.f32 1.5, %v634
        %v636 = vmul.f32 %v631, %v635
        %vm637 = vweird.f32 %v623
        %vm638 = vweird.f32 %v631
        %vm639 = vmor %vm637, %vm638
        %v640 = vsel %vm639, %v631, %v636
        %v641 = vrsqrt.pop %v624
        %v642 = vmul.f32 %v641, %v624
        %v643 = vmul.f32 %v642, %v641
        %v644 = vmul.f32 0.5, %v643
        %v645 = vsub.f32 1.5, %v644
        %v646 = vmul.f32 %v641, %v645
        %vm647 = vweird.f32 %v624
        %vm648 = vweird.f32 %v641
        %vm649 = vmor %vm647, %vm648
        %v650 = vsel %vm649, %v641, %v646
        %v651 = vrsqrt.pop %v625
        %v652 = vmul.f32 %v651, %v625
        %v653 = vmul.f32 %v652, %v651
        %v654 = vmul.f32 0.5, %v653
        %v655 = vsub.f32 1.5, %v654
        %v656 = vmul.f32 %v651, %v655
        %vm657 = vweird.f32 %v625
        %vm658 = vweird.f32 %v651
        %vm659 = vmor %vm657, %vm658
        %v660 = vsel %vm659, %v651, %v656
        %v661 = vrsqrt.pop %v626
        %v662 = vmul.f32 %v661, %v626
        %v663 = vmul.f32 %v662, %v661
        %v664 = vmul.f32 0.5, %v663
        %v665 = vsub.f32 1.5, %v664
        %v666 = vmul.f32 %v661, %v665
        %vm667 = vweird.f32 %v626
        %vm668 = vweird.f32 %v661
        %vm669 = vmor %vm667, %vm668
        %v670 = vsel %vm669, %v661, %v666
        %v671 = vrsqrt.pop %v627
        %v672 = vmul.f32 %v671, %v627
        %v673 = vmul.f32 %v672, %v671
        %v674 = vmul.f32 0.5, %v673
        %v675 = vsub.f32 1.5, %v674
        %v676 = vmul.f32 %v671, %v675
        %vm677 = vweird.f32 %v627
        %vm678 = vweird.f32 %v671
        %vm679 = vmor %vm677, %vm678
        %v680 = vsel %vm679, %v671, %v676
        %v681 = vrsqrt.pop %v628
        %v682 = vmul.f32 %v681, %v628
        %v683 = vmul.f32 %v682, %v681
        %v684 = vmul.f32 0.5, %v683
        %v685 = vsub.f32 1.5, %v684
        %v686 = vmul.f32 %v681, %v685
        %vm687 = vweird.f32 %v628
        %vm688 = vweird.f32 %v681
        %vm689 = vmor %vm687, %vm688
        %v690 = vsel %vm689, %v681, %v686
        %v691 = vrsqrt.pop %v629
        %v692 = vmul.f32 %v691, %v629
        %v693 = vmul.f32 %v692, %v691
        %v694 = vmul.f32 0.5, %v693
        %v695 = vsub.f32 1.5, %v694
        %v696 = vmul.f32 %v691, %v695
        %vm697 = vweird.f32 %v629
        %vm698 = vweird.f32 %v691
        %vm699 = vmor %vm697, %vm698
        %v700 = vsel %vm699, %v691, %v696
        %v701 = vrsqrt.pop %v630
        %v702 = vmul.f32 %v701, %v630
        %v703 = vmul.f32 %v702, %v701
        %v704 = vmul.f32 0.5, %v703
        %v705 = vsub.f32 1.5, %v704
        %v706 = vmul.f32 %v701, %v705
        %vm707 = vweird.f32 %v630
        %vm708 = vweird.f32 %v701
        %vm709 = vmor %vm707, %vm708
        %v710 = vsel %vm709, %v701, %v706
        %v711 = vmul.f32 %v607, %v640
        %v712 = vmul.f32 %v608, %v640
        %v713 = vmul.f32 %v609, %v650
        %v714 = vmul.f32 %v610, %v650
        %v715 = vmul.f32 %v611, %v660
        %v716 = vmul.f32 %v612, %v660
        %v717 = vmul.f32 %v613, %v670
        %v718 = vmul.f32 %v614, %v670
        %v719 = vmul.f32 %v615, %v680
        %v720 = vmul.f32 %v616, %v680
        %v721 = vmul.f32 %v617, %v690
        %v722 = vmul.f32 %v618, %v690
        %v723 = vmul.f32 %v619, %v700
        %v724 = vmul.f32 %v620, %v700
        %v725 = vmul.f32 %v621, %v710
        %v726 = vmul.f32 %v622, %v710
        %v727 = vmax.f32 %v711, 0.0
        %v728 = vmax.f32 %v712, 0.0
        %v729 = vmax.f32 %v713, 0.0
        %v730 = vmax.f32 %v714, 0.0
        %v731 = vmax.f32 %v715, 0.0
        %v732 = vmax.f32 %v716, 0.0
        %v733 = vmax.f32 %v717, 0.0
        %v734 = vmax.f32 %v718, 0.0
        %v735 = vmax.f32 %v719, 0.0
        %v736 = vmax.f32 %v720, 0.0
        %v737 = vmax.f32 %v721, 0.0
        %v738 = vmax.f32 %v722, 0.0
        %v739 = vmax.f32 %v723, 0.0
        %v740 = vmax.f32 %v724, 0.0
        %v741 = vmax.f32 %v725, 0.0
        %v742 = vmax.f32 %v726, 0.0
        %v743 = vpack.c.bf16 %v728, %v727
        %v744 = vpack.c.bf16 %v730, %v729
        %v745 = vpack.c.bf16 %v732, %v731
        %v746 = vpack.c.bf16 %v734, %v733
        %v747 = vpack.c.bf16 %v736, %v735
        %v748 = vpack.c.bf16 %v738, %v737
        %v749 = vpack.c.bf16 %v740, %v739
        %v750 = vpack.c.bf16 %v742, %v741
        %v751 = vld [vmem:[%s3] sm:$0xf]
        %v752 = vld [vmem:[%s3 + $0x4] sm:$0xf]
        %v753 = vld [vmem:[%s3 + $0x8] sm:$0xf]
        %v754 = vld [vmem:[%s3 + $0xc] sm:$0xf]
        %v755 = vld [vmem:[%s3 + $0x10] sm:$0xf]
        %v756 = vld [vmem:[%s3 + $0x14] sm:$0xf]
        %v757 = vld [vmem:[%s3 + $0x18] sm:$0xf]
        %v758 = vld [vmem:[%s3 + $0x1c] sm:$0xf]
        %v759 = vld [vmem:[%s4] sm:$0x1]
        %v761 = vperm.slane %v759, 0
        %v771 = vunpack.c.l.b16 %v751
        %v772 = vunpack.c.l.b16 %v752
        %v773 = vunpack.c.l.b16 %v753
        %v774 = vunpack.c.l.b16 %v754
        %v775 = vunpack.c.l.b16 %v755
        %v776 = vunpack.c.l.b16 %v756
        %v777 = vunpack.c.l.b16 %v757
        %v778 = vunpack.c.l.b16 %v758
        %v779 = vpack.c.b16 %v772, %v771
        %v780 = vpack.c.b16 %v774, %v773
        %v781 = vpack.c.b16 %v776, %v775
        %v782 = vpack.c.b16 %v778, %v777
        %v788 = vsel %vm406, %v743, 0
        %v791 = vsel %vm406, %v744, 0
        %v794 = vsel %vm406, %v745, 0
        %v797 = vsel %vm406, %v746, 0
        %v800 = vsel %vm406, %v747, 0
        %v803 = vsel %vm406, %v748, 0
        %v806 = vsel %vm406, %v749, 0
        %v809 = vsel %vm406, %v750, 0
        %811 = vmatpush.bf16.msra.mxu0 0
        %812 = vmatpush.bf16.msra.mxu0 0
        %813 = vmatpush.bf16.msra.mxu0 0
        %814 = vmatpush.bf16.msra.mxu0 0
        %815 = vmatpush.bf16.msra.mxu0 %v782
        %816 = vmatpush.bf16.msra.mxu0 %v781
        %817 = vmatpush.bf16.msra.mxu0 %v780
        %818 = vmatpush.bf16.msra.mxu0 %v779
        %819 = vmatmul.bf16.gmra.mxu0 %v788
        %v820 = vpop.f32.mrf.mxu0
        %v821 = vadd.f32 %v761, %v820
        %v822 = vpop.f32.mrf.mxu0
        %v823 = vadd.f32 %v761, %v822
        %824 = vmatmul.bf16.gmra.mxu0 %v791
        %v825 = vpop.f32.mrf.mxu0
        %v826 = vadd.f32 %v761, %v825
        %v827 = vpop.f32.mrf.mxu0
        %v828 = vadd.f32 %v761, %v827
        %829 = vmatmul.bf16.gmra.mxu0 %v794
        %v830 = vpop.f32.mrf.mxu0
        %v831 = vadd.f32 %v761, %v830
        %v832 = vpop.f32.mrf.mxu0
        %v833 = vadd.f32 %v761, %v832
        %834 = vmatmul.bf16.gmra.mxu0 %v797
        %v835 = vpop.f32.mrf.mxu0
        %v836 = vadd.f32 %v761, %v835
        %v837 = vpop.f32.mrf.mxu0
        %v838 = vadd.f32 %v761, %v837
        %839 = vmatmul.bf16.gmra.mxu0 %v800
        %v840 = vpop.f32.mrf.mxu0
        %v841 = vadd.f32 %v761, %v840
        %v842 = vpop.f32.mrf.mxu0
        %v843 = vadd.f32 %v761, %v842
        %844 = vmatmul.bf16.gmra.mxu0 %v803
        %v845 = vpop.f32.mrf.mxu0
        %v846 = vadd.f32 %v761, %v845
        %v847 = vpop.f32.mrf.mxu0
        %v848 = vadd.f32 %v761, %v847
        %849 = vmatmul.bf16.gmra.mxu0 %v806
        %v850 = vpop.f32.mrf.mxu0
        %v851 = vadd.f32 %v761, %v850
        %v852 = vpop.f32.mrf.mxu0
        %v853 = vadd.f32 %v761, %v852
        %854 = vmatmul.bf16.gmra.mxu0 %v809
        %v855 = vpop.f32.mrf.mxu0
        %v856 = vadd.f32 %v761, %v855
        %v857 = vpop.f32.mrf.mxu0
        %v858 = vadd.f32 %v761, %v857
        %859 = vdwg.mxu0
        %v860 = vxor.u32 %v821, 2147483648
        %v861 = vxor.u32 %v823, 2147483648
        %v862 = vxor.u32 %v826, 2147483648
        %v863 = vxor.u32 %v828, 2147483648
        %v864 = vxor.u32 %v831, 2147483648
        %v865 = vxor.u32 %v833, 2147483648
        %v866 = vxor.u32 %v836, 2147483648
        %v867 = vxor.u32 %v838, 2147483648
        %v868 = vxor.u32 %v841, 2147483648
        %v869 = vxor.u32 %v843, 2147483648
        %v870 = vxor.u32 %v846, 2147483648
        %v871 = vxor.u32 %v848, 2147483648
        %v872 = vxor.u32 %v851, 2147483648
        %v873 = vxor.u32 %v853, 2147483648
        %v874 = vxor.u32 %v856, 2147483648
        %v875 = vxor.u32 %v858, 2147483648
        %v876 = vmul.f32 %v860, 1.442695
        %v877 = vpow.pop %v876
        %v878 = vmul.f32 %v861, 1.442695
        %v879 = vpow.pop %v878
        %v880 = vmul.f32 %v862, 1.442695
        %v881 = vpow.pop %v880
        %v882 = vmul.f32 %v863, 1.442695
        %v883 = vpow.pop %v882
        %v884 = vmul.f32 %v864, 1.442695
        %v885 = vpow.pop %v884
        %v886 = vmul.f32 %v865, 1.442695
        %v887 = vpow.pop %v886
        %v888 = vmul.f32 %v866, 1.442695
        %v889 = vpow.pop %v888
        %v890 = vmul.f32 %v867, 1.442695
        %v891 = vpow.pop %v890
        %v892 = vmul.f32 %v868, 1.442695
        %v893 = vpow.pop %v892
        %v894 = vmul.f32 %v869, 1.442695
        %v895 = vpow.pop %v894
        %v896 = vmul.f32 %v870, 1.442695
        %v897 = vpow.pop %v896
        %v898 = vmul.f32 %v871, 1.442695
        %v899 = vpow.pop %v898
        %v900 = vmul.f32 %v872, 1.442695
        %v901 = vpow.pop %v900
        %v902 = vmul.f32 %v873, 1.442695
        %v903 = vpow.pop %v902
        %v904 = vmul.f32 %v874, 1.442695
        %v905 = vpow.pop %v904
        %v906 = vmul.f32 %v875, 1.442695
        %v907 = vpow.pop %v906
        %v908 = vadd.f32 %v877, 1.0
        %v909 = vadd.f32 %v879, 1.0
        %v910 = vadd.f32 %v881, 1.0
        %v911 = vadd.f32 %v883, 1.0
        %v912 = vadd.f32 %v885, 1.0
        %v913 = vadd.f32 %v887, 1.0
        %v914 = vadd.f32 %v889, 1.0
        %v915 = vadd.f32 %v891, 1.0
        %v916 = vadd.f32 %v893, 1.0
        %v917 = vadd.f32 %v895, 1.0
        %v918 = vadd.f32 %v897, 1.0
        %v919 = vadd.f32 %v899, 1.0
        %v920 = vadd.f32 %v901, 1.0
        %v921 = vadd.f32 %v903, 1.0
        %v922 = vadd.f32 %v905, 1.0
        %v923 = vadd.f32 %v907, 1.0
        %v924 = vrcp.pop %v908
        %v925 = vmul.f32 %v908, %v924
        %v926 = vsub.f32 1.0, %v925
        %v927 = vmul.f32 %v924, %v926
        %v928 = vadd.f32 %v924, %v927
        %vm929 = vweird.f32 %v908
        %vm930 = vweird.f32 %v924
        %vm931 = vmor %vm929, %vm930
        %v932 = vsel %vm931, %v924, %v928
        %v933 = vand.u32 2147483647, %v908
        %vm934 = vcmp.eq.f32.partialorder %v933, 8.507059e+37
        %v935 = vand.u32 %v908, 2147483648
        %v936 = vor.u32 1.1754944e-38, %v935
        %v937 = vsel %vm934, %v936, %v932
        %v938 = vmul.f32 1.0, %v937
        %v939 = vrcp.pop %v909
        %v940 = vmul.f32 %v909, %v939
        %v941 = vsub.f32 1.0, %v940
        %v942 = vmul.f32 %v939, %v941
        %v943 = vadd.f32 %v939, %v942
        %vm944 = vweird.f32 %v909
        %vm945 = vweird.f32 %v939
        %vm946 = vmor %vm944, %vm945
        %v947 = vsel %vm946, %v939, %v943
        %v948 = vand.u32 2147483647, %v909
        %vm949 = vcmp.eq.f32.partialorder %v948, 8.507059e+37
        %v950 = vand.u32 %v909, 2147483648
        %v951 = vor.u32 1.1754944e-38, %v950
        %v952 = vsel %vm949, %v951, %v947
        %v953 = vmul.f32 1.0, %v952
        %v954 = vrcp.pop %v910
        %v955 = vmul.f32 %v910, %v954
        %v956 = vsub.f32 1.0, %v955
        %v957 = vmul.f32 %v954, %v956
        %v958 = vadd.f32 %v954, %v957
        %vm959 = vweird.f32 %v910
        %vm960 = vweird.f32 %v954
        %vm961 = vmor %vm959, %vm960
        %v962 = vsel %vm961, %v954, %v958
        %v963 = vand.u32 2147483647, %v910
        %vm964 = vcmp.eq.f32.partialorder %v963, 8.507059e+37
        %v965 = vand.u32 %v910, 2147483648
        %v966 = vor.u32 1.1754944e-38, %v965
        %v967 = vsel %vm964, %v966, %v962
        %v968 = vmul.f32 1.0, %v967
        %v969 = vrcp.pop %v911
        %v970 = vmul.f32 %v911, %v969
        %v971 = vsub.f32 1.0, %v970
        %v972 = vmul.f32 %v969, %v971
        %v973 = vadd.f32 %v969, %v972
        %vm974 = vweird.f32 %v911
        %vm975 = vweird.f32 %v969
        %vm976 = vmor %vm974, %vm975
        %v977 = vsel %vm976, %v969, %v973
        %v978 = vand.u32 2147483647, %v911
        %vm979 = vcmp.eq.f32.partialorder %v978, 8.507059e+37
        %v980 = vand.u32 %v911, 2147483648
        %v981 = vor.u32 1.1754944e-38, %v980
        %v982 = vsel %vm979, %v981, %v977
        %v983 = vmul.f32 1.0, %v982
        %v984 = vrcp.pop %v912
        %v985 = vmul.f32 %v912, %v984
        %v986 = vsub.f32 1.0, %v985
        %v987 = vmul.f32 %v984, %v986
        %v988 = vadd.f32 %v984, %v987
        %vm989 = vweird.f32 %v912
        %vm990 = vweird.f32 %v984
        %vm991 = vmor %vm989, %vm990
        %v992 = vsel %vm991, %v984, %v988
        %v993 = vand.u32 2147483647, %v912
        %vm994 = vcmp.eq.f32.partialorder %v993, 8.507059e+37
        %v995 = vand.u32 %v912, 2147483648
        %v996 = vor.u32 1.1754944e-38, %v995
        %v997 = vsel %vm994, %v996, %v992
        %v998 = vmul.f32 1.0, %v997
        %v999 = vrcp.pop %v913
        %v1000 = vmul.f32 %v913, %v999
        %v1001 = vsub.f32 1.0, %v1000
        %v1002 = vmul.f32 %v999, %v1001
        %v1003 = vadd.f32 %v999, %v1002
        %vm1004 = vweird.f32 %v913
        %vm1005 = vweird.f32 %v999
        %vm1006 = vmor %vm1004, %vm1005
        %v1007 = vsel %vm1006, %v999, %v1003
        %v1008 = vand.u32 2147483647, %v913
        %vm1009 = vcmp.eq.f32.partialorder %v1008, 8.507059e+37
        %v1010 = vand.u32 %v913, 2147483648
        %v1011 = vor.u32 1.1754944e-38, %v1010
        %v1012 = vsel %vm1009, %v1011, %v1007
        %v1013 = vmul.f32 1.0, %v1012
        %v1014 = vrcp.pop %v914
        %v1015 = vmul.f32 %v914, %v1014
        %v1016 = vsub.f32 1.0, %v1015
        %v1017 = vmul.f32 %v1014, %v1016
        %v1018 = vadd.f32 %v1014, %v1017
        %vm1019 = vweird.f32 %v914
        %vm1020 = vweird.f32 %v1014
        %vm1021 = vmor %vm1019, %vm1020
        %v1022 = vsel %vm1021, %v1014, %v1018
        %v1023 = vand.u32 2147483647, %v914
        %vm1024 = vcmp.eq.f32.partialorder %v1023, 8.507059e+37
        %v1025 = vand.u32 %v914, 2147483648
        %v1026 = vor.u32 1.1754944e-38, %v1025
        %v1027 = vsel %vm1024, %v1026, %v1022
        %v1028 = vmul.f32 1.0, %v1027
        %v1029 = vrcp.pop %v915
        %v1030 = vmul.f32 %v915, %v1029
        %v1031 = vsub.f32 1.0, %v1030
        %v1032 = vmul.f32 %v1029, %v1031
        %v1033 = vadd.f32 %v1029, %v1032
        %vm1034 = vweird.f32 %v915
        %vm1035 = vweird.f32 %v1029
        %vm1036 = vmor %vm1034, %vm1035
        %v1037 = vsel %vm1036, %v1029, %v1033
        %v1038 = vand.u32 2147483647, %v915
        %vm1039 = vcmp.eq.f32.partialorder %v1038, 8.507059e+37
        %v1040 = vand.u32 %v915, 2147483648
        %v1041 = vor.u32 1.1754944e-38, %v1040
        %v1042 = vsel %vm1039, %v1041, %v1037
        %v1043 = vmul.f32 1.0, %v1042
        %v1044 = vrcp.pop %v916
        %v1045 = vmul.f32 %v916, %v1044
        %v1046 = vsub.f32 1.0, %v1045
        %v1047 = vmul.f32 %v1044, %v1046
        %v1048 = vadd.f32 %v1044, %v1047
        %vm1049 = vweird.f32 %v916
        %vm1050 = vweird.f32 %v1044
        %vm1051 = vmor %vm1049, %vm1050
        %v1052 = vsel %vm1051, %v1044, %v1048
        %v1053 = vand.u32 2147483647, %v916
        %vm1054 = vcmp.eq.f32.partialorder %v1053, 8.507059e+37
        %v1055 = vand.u32 %v916, 2147483648
        %v1056 = vor.u32 1.1754944e-38, %v1055
        %v1057 = vsel %vm1054, %v1056, %v1052
        %v1058 = vmul.f32 1.0, %v1057
        %v1059 = vrcp.pop %v917
        %v1060 = vmul.f32 %v917, %v1059
        %v1061 = vsub.f32 1.0, %v1060
        %v1062 = vmul.f32 %v1059, %v1061
        %v1063 = vadd.f32 %v1059, %v1062
        %vm1064 = vweird.f32 %v917
        %vm1065 = vweird.f32 %v1059
        %vm1066 = vmor %vm1064, %vm1065
        %v1067 = vsel %vm1066, %v1059, %v1063
        %v1068 = vand.u32 2147483647, %v917
        %vm1069 = vcmp.eq.f32.partialorder %v1068, 8.507059e+37
        %v1070 = vand.u32 %v917, 2147483648
        %v1071 = vor.u32 1.1754944e-38, %v1070
        %v1072 = vsel %vm1069, %v1071, %v1067
        %v1073 = vmul.f32 1.0, %v1072
        %v1074 = vrcp.pop %v918
        %v1075 = vmul.f32 %v918, %v1074
        %v1076 = vsub.f32 1.0, %v1075
        %v1077 = vmul.f32 %v1074, %v1076
        %v1078 = vadd.f32 %v1074, %v1077
        %vm1079 = vweird.f32 %v918
        %vm1080 = vweird.f32 %v1074
        %vm1081 = vmor %vm1079, %vm1080
        %v1082 = vsel %vm1081, %v1074, %v1078
        %v1083 = vand.u32 2147483647, %v918
        %vm1084 = vcmp.eq.f32.partialorder %v1083, 8.507059e+37
        %v1085 = vand.u32 %v918, 2147483648
        %v1086 = vor.u32 1.1754944e-38, %v1085
        %v1087 = vsel %vm1084, %v1086, %v1082
        %v1088 = vmul.f32 1.0, %v1087
        %v1089 = vrcp.pop %v919
        %v1090 = vmul.f32 %v919, %v1089
        %v1091 = vsub.f32 1.0, %v1090
        %v1092 = vmul.f32 %v1089, %v1091
        %v1093 = vadd.f32 %v1089, %v1092
        %vm1094 = vweird.f32 %v919
        %vm1095 = vweird.f32 %v1089
        %vm1096 = vmor %vm1094, %vm1095
        %v1097 = vsel %vm1096, %v1089, %v1093
        %v1098 = vand.u32 2147483647, %v919
        %vm1099 = vcmp.eq.f32.partialorder %v1098, 8.507059e+37
        %v1100 = vand.u32 %v919, 2147483648
        %v1101 = vor.u32 1.1754944e-38, %v1100
        %v1102 = vsel %vm1099, %v1101, %v1097
        %v1103 = vmul.f32 1.0, %v1102
        %v1104 = vrcp.pop %v920
        %v1105 = vmul.f32 %v920, %v1104
        %v1106 = vsub.f32 1.0, %v1105
        %v1107 = vmul.f32 %v1104, %v1106
        %v1108 = vadd.f32 %v1104, %v1107
        %vm1109 = vweird.f32 %v920
        %vm1110 = vweird.f32 %v1104
        %vm1111 = vmor %vm1109, %vm1110
        %v1112 = vsel %vm1111, %v1104, %v1108
        %v1113 = vand.u32 2147483647, %v920
        %vm1114 = vcmp.eq.f32.partialorder %v1113, 8.507059e+37
        %v1115 = vand.u32 %v920, 2147483648
        %v1116 = vor.u32 1.1754944e-38, %v1115
        %v1117 = vsel %vm1114, %v1116, %v1112
        %v1118 = vmul.f32 1.0, %v1117
        %v1119 = vrcp.pop %v921
        %v1120 = vmul.f32 %v921, %v1119
        %v1121 = vsub.f32 1.0, %v1120
        %v1122 = vmul.f32 %v1119, %v1121
        %v1123 = vadd.f32 %v1119, %v1122
        %vm1124 = vweird.f32 %v921
        %vm1125 = vweird.f32 %v1119
        %vm1126 = vmor %vm1124, %vm1125
        %v1127 = vsel %vm1126, %v1119, %v1123
        %v1128 = vand.u32 2147483647, %v921
        %vm1129 = vcmp.eq.f32.partialorder %v1128, 8.507059e+37
        %v1130 = vand.u32 %v921, 2147483648
        %v1131 = vor.u32 1.1754944e-38, %v1130
        %v1132 = vsel %vm1129, %v1131, %v1127
        %v1133 = vmul.f32 1.0, %v1132
        %v1134 = vrcp.pop %v922
        %v1135 = vmul.f32 %v922, %v1134
        %v1136 = vsub.f32 1.0, %v1135
        %v1137 = vmul.f32 %v1134, %v1136
        %v1138 = vadd.f32 %v1134, %v1137
        %vm1139 = vweird.f32 %v922
        %vm1140 = vweird.f32 %v1134
        %vm1141 = vmor %vm1139, %vm1140
        %v1142 = vsel %vm1141, %v1134, %v1138
        %v1143 = vand.u32 2147483647, %v922
        %vm1144 = vcmp.eq.f32.partialorder %v1143, 8.507059e+37
        %v1145 = vand.u32 %v922, 2147483648
        %v1146 = vor.u32 1.1754944e-38, %v1145
        %v1147 = vsel %vm1144, %v1146, %v1142
        %v1148 = vmul.f32 1.0, %v1147
        %v1149 = vrcp.pop %v923
        %v1150 = vmul.f32 %v923, %v1149
        %v1151 = vsub.f32 1.0, %v1150
        %v1152 = vmul.f32 %v1149, %v1151
        %v1153 = vadd.f32 %v1149, %v1152
        %vm1154 = vweird.f32 %v923
        %vm1155 = vweird.f32 %v1149
        %vm1156 = vmor %vm1154, %vm1155
        %v1157 = vsel %vm1156, %v1149, %v1153
        %v1158 = vand.u32 2147483647, %v923
        %vm1159 = vcmp.eq.f32.partialorder %v1158, 8.507059e+37
        %v1160 = vand.u32 %v923, 2147483648
        %v1161 = vor.u32 1.1754944e-38, %v1160
        %v1162 = vsel %vm1159, %v1161, %v1157
        %v1163 = vmul.f32 1.0, %v1162
        %1164 = vst.msk [vmem:[%s283] sm:$0xff] %vm332, %v938
        %1165 = vst.msk [vmem:[%s283 + $0x8] sm:$0xff] %vm332, %v953
        %1166 = vst.msk [vmem:[%s283 + $0x10] sm:$0xff] %vm332, %v968
        %1167 = vst.msk [vmem:[%s283 + $0x18] sm:$0xff] %vm332, %v983
        %1168 = vst.msk [vmem:[%s283 + $0x20] sm:$0xff] %vm332, %v998
        %1169 = vst.msk [vmem:[%s283 + $0x28] sm:$0xff] %vm332, %v1013
        %1170 = vst.msk [vmem:[%s283 + $0x30] sm:$0xff] %vm332, %v1028
        %1171 = vst.msk [vmem:[%s283 + $0x38] sm:$0xff] %vm332, %v1043
        %1172 = vst.msk [vmem:[%s283 + $0x40] sm:$0xff] %vm332, %v1058
        %1173 = vst.msk [vmem:[%s283 + $0x48] sm:$0xff] %vm332, %v1073
        %1174 = vst.msk [vmem:[%s283 + $0x50] sm:$0xff] %vm332, %v1088
        %1175 = vst.msk [vmem:[%s283 + $0x58] sm:$0xff] %vm332, %v1103
        %1176 = vst.msk [vmem:[%s283 + $0x60] sm:$0xff] %vm332, %v1118
        %1177 = vst.msk [vmem:[%s283 + $0x68] sm:$0xff] %vm332, %v1133
        %1178 = vst.msk [vmem:[%s283 + $0x70] sm:$0xff] %vm332, %v1148
        %1179 = vst.msk [vmem:[%s283 + $0x78] sm:$0xff] %vm332, %v1163
        %v1180 = vmul.f32 %v288, %v938
        %v1181 = vmul.f32 %v289, %v953
        %v1182 = vmul.f32 %v290, %v968
        %v1183 = vmul.f32 %v291, %v983
        %v1184 = vmul.f32 %v292, %v998
        %v1185 = vmul.f32 %v293, %v1013
        %v1186 = vmul.f32 %v294, %v1028
        %v1187 = vmul.f32 %v295, %v1043
        %v1188 = vmul.f32 %v296, %v1058
        %v1189 = vmul.f32 %v297, %v1073
        %v1190 = vmul.f32 %v298, %v1088
        %v1191 = vmul.f32 %v299, %v1103
        %v1192 = vmul.f32 %v300, %v1118
        %v1193 = vmul.f32 %v301, %v1133
        %v1194 = vmul.f32 %v302, %v1148
        %v1195 = vmul.f32 %v303, %v1163
        %1196 = vst.msk [vmem:[%s276] sm:$0xff] %vm332, %v1180
        %1197 = vst.msk [vmem:[%s276 + $0x8] sm:$0xff] %vm332, %v1181
        %1198 = vst.msk [vmem:[%s276 + $0x10] sm:$0xff] %vm332, %v1182
        %1199 = vst.msk [vmem:[%s276 + $0x18] sm:$0xff] %vm332, %v1183
        %1200 = vst.msk [vmem:[%s276 + $0x20] sm:$0xff] %vm332, %v1184
        %1201 = vst.msk [vmem:[%s276 + $0x28] sm:$0xff] %vm332, %v1185
        %1202 = vst.msk [vmem:[%s276 + $0x30] sm:$0xff] %vm332, %v1186
        %1203 = vst.msk [vmem:[%s276 + $0x38] sm:$0xff] %vm332, %v1187
        %1204 = vst.msk [vmem:[%s276 + $0x40] sm:$0xff] %vm332, %v1188
        %1205 = vst.msk [vmem:[%s276 + $0x48] sm:$0xff] %vm332, %v1189
        %1206 = vst.msk [vmem:[%s276 + $0x50] sm:$0xff] %vm332, %v1190
        %1207 = vst.msk [vmem:[%s276 + $0x58] sm:$0xff] %vm332, %v1191
        %1208 = vst.msk [vmem:[%s276 + $0x60] sm:$0xff] %vm332, %v1192
        %1209 = vst.msk [vmem:[%s276 + $0x68] sm:$0xff] %vm332, %v1193
        %1210 = vst.msk [vmem:[%s276 + $0x70] sm:$0xff] %vm332, %v1194
        %1211 = vst.msk [vmem:[%s276 + $0x78] sm:$0xff] %vm332, %v1195
        %s1212 = sand.u32 %s145, 1
        %s1213 = scalar_lea.sflag [#allocation4], %s1212
        %s1214 = sand.u32 %s145, 1
        %s1215 = smul.addr %s1214, 128
        %s1216 = scalar_lea.vmem [#allocation5], %s1215
        %s1217 = sand.u32 %s171, 1
        %s1218 = scalar_lea.sflag [#allocation7], %s1217
        %s1219 = sand.u32 %s171, 1
        %s1220 = smul.addr %s1219, 128
        %s1221 = scalar_lea.vmem [#allocation6], %s1220
        // Predicated region
        $region45: #{tpu_custom_call.1} parent=39 // pred_check
          %p1222 = pneg %p155
        $region46: #{tpu_custom_call.1} parent=39 // pred_check_branch
          %1224 = sbr.rel (%p1222) target = $region48
        $region47: #{tpu_custom_call.1} parent=39 // pred_region
          %s1225 = smul.u32 8, %s27
          %1227 = vsyncadd %s1213, 0
          %s1228 = smul.addr %s1225, 2
          %s1229 = smul.addr %s1228, 8
          %s1230 = scalar_lea.hbm %s5, %s1229
          %s1231 = sshll.u32 %s1216, 4
          %s1232 = int_to_ptr.vmem [resolvable:$true] %s1231
          %s1233 = sshll.u32 %s1230, 4
          %s1234 = int_to_ptr.hbm [resolvable:$true] %s1233
          %1239 = dma.vmem_to_hbm [thread:$0]  %s1232, 2048, %s1234, %s1213, 128, 128, 8
        $region48: #{tpu_custom_call.1} parent=39 // pred_fallthru
          _
        // Predicated region
        $region49: #{tpu_custom_call.1} parent=39 // pred_check
          %p1240 = pneg %p181
        $region50: #{tpu_custom_call.1} parent=39 // pred_check_branch
          %1242 = sbr.rel (%p1240) target = $region52
        $region51: #{tpu_custom_call.1} parent=39 // pred_region
          %s1243 = smul.u32 8, %s27
          %1245 = vsyncadd %s1218, 0
          %s1246 = smul.addr %s1243, 2
          %s1247 = smul.addr %s1246, 8
          %s1248 = scalar_lea.hbm %s6, %s1247
          %s1249 = sshll.u32 %s1221, 4
          %s1250 = int_to_ptr.vmem [resolvable:$true] %s1249
          %s1251 = sshll.u32 %s1248, 4
          %s1252 = int_to_ptr.hbm [resolvable:$true] %s1251
          %1257 = dma.vmem_to_hbm [thread:$0]  %s1250, 2048, %s1252, %s1218, 128, 128, 8
        $region52: #{tpu_custom_call.1} parent=39 // pred_fallthru
          _
      $region40: #{tpu_custom_call.1} parent=5 // pred_fallthru
        _
      %p1258 = scmp.le.s32.totalorder 2, %s22
      // Predicated region
      $region53: #{tpu_custom_call.1} parent=5 // pred_check
        %p1259 = pneg %p1258
      $region54: #{tpu_custom_call.1} parent=5 // pred_check_branch
        %1261 = sbr.rel (%p1259) target = $region56
      $region55: #{tpu_custom_call.1} parent=5 // pred_region
        %s1262 = ssub.s32 %s22, 2
        // Predicated region
        $region57: #{tpu_custom_call.1} parent=55 // pred_check
          %p1263 = pneg %p161
        $region58: #{tpu_custom_call.1} parent=55 // pred_check_branch
          %1265 = sbr.rel (%p1263) target = $region60
        $region59: #{tpu_custom_call.1} parent=55 // pred_region
          %s1266 = sand.u32 %s146, 1
          %s1267 = scalar_lea.sflag [#allocation4], %s1266
          %s1268 = sand.u32 %s146, 1
          %s1269 = smul.addr %s1268, 128
          %s1270 = scalar_lea.vmem [#allocation5], %s1269
          %1272 = dma.done %s1267, 2048
        $region60: #{tpu_custom_call.1} parent=55 // pred_fallthru
          _
        // Predicated region
        $region61: #{tpu_custom_call.1} parent=55 // pred_check
          %p1273 = pneg %p187
        $region62: #{tpu_custom_call.1} parent=55 // pred_check_branch
          %1275 = sbr.rel (%p1273) target = $region64
        $region63: #{tpu_custom_call.1} parent=55 // pred_region
          %s1276 = sand.u32 %s172, 1
          %s1277 = scalar_lea.sflag [#allocation7], %s1276
          %s1278 = sand.u32 %s172, 1
          %s1279 = smul.addr %s1278, 128
          %s1280 = scalar_lea.vmem [#allocation6], %s1279
          %1282 = dma.done %s1277, 2048
        $region64: #{tpu_custom_call.1} parent=55 // pred_fallthru
          _
      $region56: #{tpu_custom_call.1} parent=5 // pred_fallthru
        _
    $region6: #{tpu_custom_call.1} parent=1 // loop_footer
      %s26 = sadd.s32 1, %s22
    $region7: #{tpu_custom_call.1} parent=1 // loop_footer_branch
      %21 = sbr.rel target = $region3
    $region8: #{tpu_custom_call.1} parent=1 // loop_exit
      _
    %1283 = vsyncpa [#allocation3], 1
    %s1284 = scalar_lea.sflag [#allocation3], 1
    %1285 = vsyncpa %s1284, 1
    %1286 = vsyncpa [#allocation4], 1
    %s1287 = scalar_lea.sflag [#allocation4], 1
    %1288 = vsyncpa %s1287, 1
    %1289 = vsyncpa [#allocation7], 1
    %s1290 = scalar_lea.sflag [#allocation7], 1
    %1291 = vsyncpa %s1290, 1

</llo_original>
